<compile_context>
chip_gen: v6e
topology: v6e:2x2x1
jax: 0.10.0
libtpu: 0.0.40
codegen_flags: <defaults>
</compile_context>

<pallas_src>
import jax
import jax.numpy as jnp
from jax.experimental import pallas as pl
from jax.experimental.pallas import tpu as pltpu

SUBLANE = 8  # sublane granularity for the second-to-last block dim


def _cdiv(a, b):
    return -(-a // b)


def _round_up(n, m):
    return _cdiv(n, m) * m


def _choose_batch_tiling(B, *, max_tb=1024):
    """Pick (TB, n_tiles): sublane-aligned tiles sized from B (row pad stays
    < 8*n_tiles), <= max_tb rows per tile, and an even tile count when there
    is enough work to keep both v7x TensorCores busy."""
    if B <= max_tb:
        n_tiles = 2 if B > 512 else 1
    else:
        n_tiles = _cdiv(B, max_tb)
        if n_tiles % 2:
            n_tiles += 1
    tb = _round_up(_cdiv(B, n_tiles), SUBLANE)
    return tb, n_tiles


def mlp_kernel(x_ref, w1_ref, b1_ref, w2_ref, b2_ref, w3_ref, b3_ref, o_ref):
    # Layer 1: Linear + ReLU.  Dropout(p=0.1) is identity at inference.
    x = x_ref[...].astype(jnp.bfloat16)  # cast in-kernel; x travels HBM->VMEM as f32
    h1 = jnp.dot(x, w1_ref[...], preferred_element_type=jnp.float32)
    h1 = jnp.maximum(h1 + b1_ref[...], 0.0)

    # Layer 2: Linear + ReLU (bf16 MXU operands, f32 accumulation).
    h2 = jnp.dot(h1.astype(w2_ref.dtype), w2_ref[...],
                 preferred_element_type=jnp.float32)
    h2 = jnp.maximum(h2 + b2_ref[...], 0.0)

    # Output layer: Linear + exact softmax over the (unpadded) class axis.
    logits = jnp.dot(h2.astype(w3_ref.dtype), w3_ref[...],
                     preferred_element_type=jnp.float32) + b3_ref[...]
    m = jnp.max(logits, axis=-1, keepdims=True)
    e = jnp.exp(logits - m)
    denom = jnp.sum(e, axis=-1, keepdims=True)
    o_ref[...] = e / denom  # exact divide: every row sums to 1 in f32


def neural_network_forward(x, params, *, max_tb=1024):
    """x: [B, input_size] float32; params: dict of f32 weights/biases with
    weights stored as [in_features, out_features] (i.e. y = x @ W + b)."""
    w1, b1 = params["w1"], params["b1"]
    w2, b2 = params["w2"], params["b2"]
    w3, b3 = params["w3"], params["b3"]

    B, in_features = x.shape
    h1_dim, h2_dim, num_classes = w1.shape[1], w2.shape[1], w3.shape[1]

    TB, n_tiles = _choose_batch_tiling(B, max_tb=max_tb)
    B_pad = TB * n_tiles

    # x stays f32 / feature-unpadded; at most a tiny (< 8*n_tiles row) batch
    # pad is materialized, and none at all when B already fits the tiling.
    x_in = x if B_pad == B else jnp.pad(x, ((0, B_pad - B), (0, 0)))

    # Weights are ~100 KiB total and VMEM-resident: one-time bf16 cast.
    w1_b = w1.astype(jnp.bfloat16)
    w2_b = w2.astype(jnp.bfloat16)
    w3_b = w3.astype(jnp.bfloat16)
    b1_f = b1.reshape(1, -1).astype(jnp.float32)
    b2_f = b2.reshape(1, -1).astype(jnp.float32)
    b3_f = b3.reshape(1, -1).astype(jnp.float32)

    cost = pl.CostEstimate(
        flops=2 * B_pad * (in_features * h1_dim + h1_dim * h2_dim
                           + h2_dim * num_classes),
        transcendentals=B_pad * num_classes,
        bytes_accessed=(x_in.size * 4                               # f32 x, once
                        + (w1_b.size + w2_b.size + w3_b.size) * 2   # bf16 weights
                        + (b1_f.size + b2_f.size + b3_f.size) * 4   # f32 biases
                        + B_pad * num_classes * 4),                 # f32 output
    )

    out = pl.pallas_call(
        mlp_kernel,
        out_shape=jax.ShapeDtypeStruct((B_pad, num_classes), jnp.float32),
        grid_spec=pltpu.PrefetchScalarGridSpec(
            num_scalar_prefetch=0,
            grid=(n_tiles,),
            in_specs=[
                pl.BlockSpec((TB, in_features), lambda i: (i, 0)),      # x tile
                pl.BlockSpec((in_features, h1_dim), lambda i: (0, 0)),  # w1 (resident)
                pl.BlockSpec((1, h1_dim), lambda i: (0, 0)),            # b1
                pl.BlockSpec((h1_dim, h2_dim), lambda i: (0, 0)),       # w2
                pl.BlockSpec((1, h2_dim), lambda i: (0, 0)),            # b2
                pl.BlockSpec((h2_dim, num_classes), lambda i: (0, 0)),  # w3
                pl.BlockSpec((1, num_classes), lambda i: (0, 0)),       # b3
            ],
            out_specs=pl.BlockSpec((TB, num_classes), lambda i: (i, 0)),
        ),
        compiler_params=pltpu.CompilerParams(
            dimension_semantics=("parallel",)),
        cost_estimate=cost,
    )(x_in, w1_b, b1_f, w2_b, b2_f, w3_b, b3_f)

    return out if B_pad == B else out[:B]


def init_params(key, input_size, hidden_sizes, num_classes):
    """Deterministic synthetic init (uniform, like PyTorch's default scale)."""
    ks = jax.random.split(key, 6)

    def lin(kw, kb, fan_in, fan_out):
        bound = 1.0 / jnp.sqrt(fan_in)
        w = jax.random.uniform(kw, (fan_in, fan_out), jnp.float32, -bound, bound)
        b = jax.random.uniform(kb, (1, fan_out), jnp.float32, -bound, bound)
        return w, b

    w1, b1 = lin(ks[0], ks[1], input_size, hidden_sizes[0])
    w2, b2 = lin(ks[2], ks[3], hidden_sizes[0], hidden_sizes[1])
    w3, b3 = lin(ks[4], ks[5], hidden_sizes[1], num_classes)
    return {"w1": w1, "b1": b1, "w2": w2, "b2": b2, "w3": w3, "b3": b3}


def _reference(x, params):
    """Plain-JAX reference with the same bf16 quantization of matmul operands
    (f32 accumulation / biases / softmax); dropout = identity (eval mode)."""
    q = lambda a: a.astype(jnp.bfloat16).astype(jnp.float32)
    h1 = jnp.maximum(q(x) @ q(params["w1"]) + params["b1"], 0.0)
    h2 = jnp.maximum(q(h1) @ q(params["w2"]) + params["b2"], 0.0)
    logits = q(h2) @ q(params["w3"]) + params["b3"]
    return jax.nn.softmax(logits, axis=1)


if __name__ == "__main__":
    key = jax.random.PRNGKey(0)
    k_x, k_p, k_x2 = jax.random.split(key, 3)

    input_size = 32
    hidden_sizes = [64, 128]
    num_classes = 10
    params = init_params(k_p, input_size, hidden_sizes, num_classes)

    # Small-batch case (single grid step, no padding at all).
    batch = 8
    x = jax.random.normal(k_x, (batch, input_size), jnp.float32)
    out = jax.block_until_ready(neural_network_forward(x, params))
    ref = _reference(x, params)
    assert out.shape == (batch, num_classes)
    assert bool(jnp.all(jnp.isfinite(out)))
    assert jnp.allclose(out, ref, atol=2e-3, rtol=2e-3)
    assert jnp.allclose(jnp.sum(out, axis=1), 1.0, atol=1e-3)

    # Larger batch exercising the batch-tiled grid (2 balanced tiles, 8-row pad).
    batch2 = 600
    x2 = jax.random.normal(k_x2, (batch2, input_size), jnp.float32)
    out2 = jax.block_until_ready(neural_network_forward(x2, params))
    ref2 = _reference(x2, params)
    assert out2.shape == (batch2, num_classes)
    assert bool(jnp.all(jnp.isfinite(out2)))
    assert jnp.allclose(out2, ref2, atol=2e-3, rtol=2e-3)
    assert jnp.allclose(jnp.sum(out2, axis=1), 1.0, atol=1e-3)

    print("KERNEL_OK")
</pallas_src>

<mosaic_0001>
module attributes {stable_mosaic.version = 11 : i64} {
  func.func @mlp_kernel(%arg0: i32, %arg1: memref<8x32xf32, #tpu.memory_space<vmem>>, %arg2: memref<32x64xbf16, #tpu.memory_space<vmem>>, %arg3: memref<1x64xf32, #tpu.memory_space<vmem>>, %arg4: memref<64x128xbf16, #tpu.memory_space<vmem>>, %arg5: memref<1x128xf32, #tpu.memory_space<vmem>>, %arg6: memref<128x10xbf16, #tpu.memory_space<vmem>>, %arg7: memref<1x10xf32, #tpu.memory_space<vmem>>, %arg8: memref<8x10xf32, #tpu.memory_space<vmem>>) attributes {dimension_semantics = [#tpu.dimension_semantics<parallel>], iteration_bounds = array<i64: 1>, scalar_prefetch = 0 : i64, scratch_operands = 0 : i64, tpu.core_type = #tpu.core_type<tc>, window_params = [{transform_indices = @transform_0, window_bounds = array<i64: 8, 32>}, {pipeline_mode = #tpu.pipeline_mode<synchronous>, transform_indices = @transform_1, window_bounds = array<i64: 32, 64>}, {pipeline_mode = #tpu.pipeline_mode<synchronous>, transform_indices = @transform_2, window_bounds = array<i64: 1, 64>}, {pipeline_mode = #tpu.pipeline_mode<synchronous>, transform_indices = @transform_3, window_bounds = array<i64: 64, 128>}, {pipeline_mode = #tpu.pipeline_mode<synchronous>, transform_indices = @transform_4, window_bounds = array<i64: 1, 128>}, {pipeline_mode = #tpu.pipeline_mode<synchronous>, transform_indices = @transform_5, window_bounds = array<i64: 128, 10>}, {pipeline_mode = #tpu.pipeline_mode<synchronous>, transform_indices = @transform_6, window_bounds = array<i64: 1, 10>}, {transform_indices = @transform_7, window_bounds = array<i64: 8, 10>}]} {
    %c0 = arith.constant 0 : index
    %c0_0 = arith.constant 0 : index
    %0 = vector.load %arg1[%c0, %c0_0] : memref<8x32xf32, #tpu.memory_space<vmem>>, vector<8x32xf32>
    %1 = arith.truncf %0 : vector<8x32xf32> to vector<8x32xbf16>
    %c0_1 = arith.constant 0 : index
    %c0_2 = arith.constant 0 : index
    %2 = vector.load %arg2[%c0_1, %c0_2] : memref<32x64xbf16, #tpu.memory_space<vmem>>, vector<32x64xbf16>
    %cst = arith.constant dense<0.000000e+00> : vector<8x64xf32>
    %3 = tpu.matmul %1, %2, %cst {dimension_numbers = #tpu.dot_dimension_numbers<[1], [0], [0], [1], [0, 0, 1, 1], [], []>} : vector<8x32xbf16>, vector<32x64xbf16>, vector<8x64xf32> -> vector<8x64xf32>
    %c0_3 = arith.constant 0 : index
    %c0_4 = arith.constant 0 : index
    %4 = vector.load %arg3[%c0_3, %c0_4] : memref<1x64xf32, #tpu.memory_space<vmem>>, vector<1x64xf32>
    %5 = vector.broadcast %4 : vector<1x64xf32> to vector<8x64xf32>
    %6 = arith.addf %3, %5 : vector<8x64xf32>
    %cst_5 = arith.constant 0.000000e+00 : f32
    %7 = vector.broadcast %cst_5 : f32 to vector<8x64xf32>
    %8 = arith.maximumf %6, %7 : vector<8x64xf32>
    %9 = arith.truncf %8 : vector<8x64xf32> to vector<8x64xbf16>
    %c0_6 = arith.constant 0 : index
    %c0_7 = arith.constant 0 : index
    %10 = vector.load %arg4[%c0_6, %c0_7] : memref<64x128xbf16, #tpu.memory_space<vmem>>, vector<64x128xbf16>
    %cst_8 = arith.constant dense<0.000000e+00> : vector<8x128xf32>
    %11 = tpu.matmul %9, %10, %cst_8 {dimension_numbers = #tpu.dot_dimension_numbers<[1], [0], [0], [1], [0, 0, 1, 1], [], []>} : vector<8x64xbf16>, vector<64x128xbf16>, vector<8x128xf32> -> vector<8x128xf32>
    %c0_9 = arith.constant 0 : index
    %c0_10 = arith.constant 0 : index
    %12 = vector.load %arg5[%c0_9, %c0_10] : memref<1x128xf32, #tpu.memory_space<vmem>>, vector<1x128xf32>
    %13 = vector.broadcast %12 : vector<1x128xf32> to vector<8x128xf32>
    %14 = arith.addf %11, %13 : vector<8x128xf32>
    %cst_11 = arith.constant 0.000000e+00 : f32
    %15 = vector.broadcast %cst_11 : f32 to vector<8x128xf32>
    %16 = arith.maximumf %14, %15 : vector<8x128xf32>
    %17 = arith.truncf %16 : vector<8x128xf32> to vector<8x128xbf16>
    %c0_12 = arith.constant 0 : index
    %c0_13 = arith.constant 0 : index
    %18 = vector.load %arg6[%c0_12, %c0_13] : memref<128x10xbf16, #tpu.memory_space<vmem>>, vector<128x10xbf16>
    %cst_14 = arith.constant dense<0.000000e+00> : vector<8x10xf32>
    %19 = tpu.matmul %17, %18, %cst_14 {dimension_numbers = #tpu.dot_dimension_numbers<[1], [0], [0], [1], [0, 0, 1, 1], [], []>} : vector<8x128xbf16>, vector<128x10xbf16>, vector<8x10xf32> -> vector<8x10xf32>
    %c0_15 = arith.constant 0 : index
    %c0_16 = arith.constant 0 : index
    %20 = vector.load %arg7[%c0_15, %c0_16] : memref<1x10xf32, #tpu.memory_space<vmem>>, vector<1x10xf32>
    %21 = vector.broadcast %20 : vector<1x10xf32> to vector<8x10xf32>
    %22 = arith.addf %19, %21 : vector<8x10xf32>
    %cst_17 = arith.constant dense<0xFF800000> : vector<8xf32>
    %23 = vector.multi_reduction <maximumf>, %22, %cst_17 [1] : vector<8x10xf32> to vector<8xf32>
    %24 = vector.shape_cast %23 : vector<8xf32> to vector<8x1xf32>
    %25 = vector.broadcast %24 : vector<8x1xf32> to vector<8x10xf32>
    %26 = arith.subf %22, %25 : vector<8x10xf32>
    %27 = math.exp %26 : vector<8x10xf32>
    %cst_18 = arith.constant dense<0.000000e+00> : vector<8xf32>
    %28 = vector.multi_reduction <add>, %27, %cst_18 [1] : vector<8x10xf32> to vector<8xf32>
    %29 = vector.shape_cast %28 : vector<8xf32> to vector<8x1xf32>
    %30 = vector.broadcast %29 : vector<8x1xf32> to vector<8x10xf32>
    %31 = arith.divf %27, %30 : vector<8x10xf32>
    %c0_19 = arith.constant 0 : index
    %c0_20 = arith.constant 0 : index
    %32 = vector.load %arg8[%c0_19, %c0_20] : memref<8x10xf32, #tpu.memory_space<vmem>>, vector<8x10xf32>
    tpu.vector_store %arg8[%c0_19, %c0_20], %31 {strides = array<i32>} : memref<8x10xf32, #tpu.memory_space<vmem>>, vector<8x10xf32>,
    return
  }
  func.func @transform_0(%arg0: i32) -> (i32, i32) {
    %c0_i32 = arith.constant 0 : i32
    %c0_i32_0 = arith.constant 0 : i32
    return %arg0, %c0_i32 : i32, i32
  }
  func.func @transform_1(%arg0: i32) -> (i32, i32) {
    %c0_i32 = arith.constant 0 : i32
    %c0_i32_0 = arith.constant 0 : i32
    %c0_i32_1 = arith.constant 0 : i32
    return %c0_i32, %c0_i32_0 : i32, i32
  }
  func.func @transform_2(%arg0: i32) -> (i32, i32) {
    %c0_i32 = arith.constant 0 : i32
    %c0_i32_0 = arith.constant 0 : i32
    %c0_i32_1 = arith.constant 0 : i32
    return %c0_i32, %c0_i32_0 : i32, i32
  }
  func.func @transform_3(%arg0: i32) -> (i32, i32) {
    %c0_i32 = arith.constant 0 : i32
    %c0_i32_0 = arith.constant 0 : i32
    %c0_i32_1 = arith.constant 0 : i32
    return %c0_i32, %c0_i32_0 : i32, i32
  }
  func.func @transform_4(%arg0: i32) -> (i32, i32) {
    %c0_i32 = arith.constant 0 : i32
    %c0_i32_0 = arith.constant 0 : i32
    %c0_i32_1 = arith.constant 0 : i32
    return %c0_i32, %c0_i32_0 : i32, i32
  }
  func.func @transform_5(%arg0: i32) -> (i32, i32) {
    %c0_i32 = arith.constant 0 : i32
    %c0_i32_0 = arith.constant 0 : i32
    %c0_i32_1 = arith.constant 0 : i32
    return %c0_i32, %c0_i32_0 : i32, i32
  }
  func.func @transform_6(%arg0: i32) -> (i32, i32) {
    %c0_i32 = arith.constant 0 : i32
    %c0_i32_0 = arith.constant 0 : i32
    %c0_i32_1 = arith.constant 0 : i32
    return %c0_i32, %c0_i32_0 : i32, i32
  }
  func.func @transform_7(%arg0: i32) -> (i32, i32) {
    %c0_i32 = arith.constant 0 : i32
    %c0_i32_0 = arith.constant 0 : i32
    return %arg0, %c0_i32 : i32, i32
  }
}

</mosaic_0001>

<llo_original>
// kernel: tpu_custom_call.1
$region0: #{tpu_custom_call.1}
  #allocation0 [shape = 'u32[]', space=smem, size = 0x4, offset = 0x4, fixed_abs, tag = 'smem constant byte address 0x4 - core index']
  #allocation1 [shape = 'u32[144,128]{1,0:T(1,128)}', space=vmem, size = 0x12000, scoped, tag = 'internal scratch']
  %s0 = inlined_call_operand.vmem [shape: f32[8,32], index: 0, kind: input, shape index: {}]
  %s1 = inlined_call_operand.vmem [shape: bf16[32,64], index: 1, kind: input, shape index: {}]
  %s2 = inlined_call_operand.vmem [shape: f32[1,64], index: 2, kind: input, shape index: {}]
  %s3 = inlined_call_operand.vmem [shape: bf16[64,128], index: 3, kind: input, shape index: {}]
  %s4 = inlined_call_operand.vmem [shape: f32[1,128], index: 4, kind: input, shape index: {}]
  %s5 = inlined_call_operand.vmem [shape: bf16[128,10], index: 5, kind: input, shape index: {}]
  %s6 = inlined_call_operand.vmem [shape: f32[1,10], index: 6, kind: input, shape index: {}]
  %s7 = inlined_call_operand.hbm [shape: f32[8,10], index: 7, kind: output, shape index: {}]
  %s8 = sld [smem:[#allocation0]]
  $region38: #{tpu_custom_call.1} parent=0
    _
  %s10 = ssub.s32 1, %s8
  %s11 = scalar_select 0, %s10, %s8
  $region1: #{tpu_custom_call.1} parent=0
    #allocation2 [shape = 'u8[4096]{0}', space=vmem, size = 0x1000, scoped, tag = 'output window, operand 0, single buffered']
    #allocation3 [shape = 's32[1]{0}', space=sflag, size = 0x4, scoped, tag = 'scoped memory for tpu_custom_call.1']
    %12 = vsyncpa [#allocation3], 0
    // Predicated region
    $region2: #{tpu_custom_call.1} parent=1 // pred_check
      _
    $region3: #{tpu_custom_call.1} parent=1 // pred_check_branch
      %14 = sbr.rel (0) target = $region5
    $region4: #{tpu_custom_call.1} parent=1 // pred_region
      _
    $region5: #{tpu_custom_call.1} parent=1 // pred_fallthru
      _
    // Predicated region
    $region6: #{tpu_custom_call.1} parent=1 // pred_check
      _
    $region7: #{tpu_custom_call.1} parent=1 // pred_check_branch
      %16 = sbr.rel (0) target = $region9
    $region8: #{tpu_custom_call.1} parent=1 // pred_region
      _
    $region9: #{tpu_custom_call.1} parent=1 // pred_fallthru
      _
    // Predicated region
    $region10: #{tpu_custom_call.1} parent=1 // pred_check
      _
    $region11: #{tpu_custom_call.1} parent=1 // pred_check_branch
      %18 = sbr.rel (0) target = $region13
    $region12: #{tpu_custom_call.1} parent=1 // pred_region
      _
    $region13: #{tpu_custom_call.1} parent=1 // pred_fallthru
      _
    // Predicated region
    $region14: #{tpu_custom_call.1} parent=1 // pred_check
      _
    $region15: #{tpu_custom_call.1} parent=1 // pred_check_branch
      %20 = sbr.rel (0) target = $region17
    $region16: #{tpu_custom_call.1} parent=1 // pred_region
      _
    $region17: #{tpu_custom_call.1} parent=1 // pred_fallthru
      _
    // Predicated region
    $region18: #{tpu_custom_call.1} parent=1 // pred_check
      _
    $region19: #{tpu_custom_call.1} parent=1 // pred_check_branch
      %22 = sbr.rel (0) target = $region21
    $region20: #{tpu_custom_call.1} parent=1 // pred_region
      _
    $region21: #{tpu_custom_call.1} parent=1 // pred_fallthru
      _
    // Predicated region
    $region22: #{tpu_custom_call.1} parent=1 // pred_check
      _
    $region23: #{tpu_custom_call.1} parent=1 // pred_check_branch
      %24 = sbr.rel (0) target = $region25
    $region24: #{tpu_custom_call.1} parent=1 // pred_region
      _
    $region25: #{tpu_custom_call.1} parent=1 // pred_fallthru
      _
    // Predicated region
    $region26: #{tpu_custom_call.1} parent=1 // pred_check
      _
    $region27: #{tpu_custom_call.1} parent=1 // pred_check_branch
      %26 = sbr.rel (0) target = $region29
    $region28: #{tpu_custom_call.1} parent=1 // pred_region
      _
    $region29: #{tpu_custom_call.1} parent=1 // pred_fallthru
      _
    %v28 = vld [vmem:[%s0] sm:$0xff]
    %v29 = vpack.c.bf16 %v28, %v28
    %v30 = vld [vmem:[%s1] sm:$0xf]
    %v31 = vld [vmem:[%s1 + $0x4] sm:$0xf]
    %v32 = vld [vmem:[%s1 + $0x8] sm:$0xf]
    %v33 = vld [vmem:[%s1 + $0xc] sm:$0xf]
    %v34 = vld [vmem:[%s2] sm:$0x1]
    %v36 = vlaneseq
    %v37 = vshrl.u32 %v36, 7
    %v38 = vsub.s32 0, %v37
    %v39 = vrot.slane %v34, %v38
    %v45 = vunpack.c.l.b16 %v30
    %v46 = vunpack.c.l.b16 %v31
    %v47 = vunpack.c.l.b16 %v32
    %v48 = vunpack.c.l.b16 %v33
    %v49 = vpack.c.b16 %v46, %v45
    %v50 = vpack.c.b16 %v48, %v47
    %vm53 = vcmask 261120
    %v55 = vsel %vm53, %v29, 0
    %57 = vmatprep.subr.bf16.mxu0 0
    %58 = vmatpush1.bf16.msra.mxu0 0
    %59 = vmatprep.subr.bf16.mxu0 0
    %60 = vmatpush1.bf16.msra.mxu0 0
    %61 = vmatprep.subr.bf16.mxu0 0
    %62 = vmatpush1.bf16.msra.mxu0 0
    %63 = vmatprep.subr.bf16.mxu0 0
    %64 = vmatpush1.bf16.msra.mxu0 0
    %65 = vmatprep.subr.bf16.mxu0 0
    %66 = vmatpush1.bf16.msra.mxu0 0
    %67 = vmatprep.subr.bf16.mxu0 0
    %68 = vmatpush1.bf16.msra.mxu0 0
    %69 = vmatprep.subr.bf16.mxu0 0
    %70 = vmatpush1.bf16.msra.mxu0 %v50
    %71 = vmatprep.subr.bf16.mxu0 0
    %72 = vmatpush1.bf16.msra.mxu0 %v49
    %73 = vmatprep.subr.bf16.mxu0 0
    %74 = vmatpush2.bf16.msra.mxu0 0
    %75 = vmatprep.subr.bf16.mxu0 0
    %76 = vmatpush2.bf16.msra.mxu0 0
    %77 = vmatprep.subr.bf16.mxu0 0
    %78 = vmatpush2.bf16.msra.mxu0 0
    %79 = vmatprep.subr.bf16.mxu0 0
    %80 = vmatpush2.bf16.msra.mxu0 0
    %81 = vmatprep.subr.bf16.mxu0 0
    %82 = vmatpush2.bf16.msra.mxu0 0
    %83 = vmatprep.subr.bf16.mxu0 0
    %84 = vmatpush2.bf16.msra.mxu0 0
    %85 = vmatprep.subr.bf16.mxu0 0
    %86 = vmatpush2.bf16.msra.mxu0 0
    %87 = vmatprep.subr.bf16.mxu0 0
    %88 = vmatpush2.bf16.msra.mxu0 0
    %89 = vmatprep.mubr.bf16.mxu0 0
    %90 = vmatmul.mubr.bf16.gmra.mxu0 %v55
    %v91 = vpop.f32.mrf.mxu0
    %v92 = vadd.f32 %v39, %v91
    %v93 = vpop.f32.mrf.mxu0
    %v94 = vpop.f32.mrf.mxu0
    %v95 = vpop.f32.mrf.mxu0
    %96 = vdwg.mxu0
    %v97 = vmax.f32 %v92, 0.0
    %v98 = vpack.c.bf16 %v97, %v97
    %v99 = vld [vmem:[%s3] sm:$0xf]
    %v100 = vld [vmem:[%s3 + $0x4] sm:$0xf]
    %v101 = vld [vmem:[%s3 + $0x8] sm:$0xf]
    %v102 = vld [vmem:[%s3 + $0xc] sm:$0xf]
    %v103 = vld [vmem:[%s3 + $0x10] sm:$0xf]
    %v104 = vld [vmem:[%s3 + $0x14] sm:$0xf]
    %v105 = vld [vmem:[%s3 + $0x18] sm:$0xf]
    %v106 = vld [vmem:[%s3 + $0x1c] sm:$0xf]
    %v107 = vld [vmem:[%s4] sm:$0x1]
    %v109 = vlaneseq
    %v110 = vshrl.u32 %v109, 7
    %v111 = vsub.s32 0, %v110
    %v112 = vrot.slane %v107, %v111
    %v122 = vunpack.c.l.b16 %v99
    %v123 = vunpack.c.l.b16 %v100
    %v124 = vunpack.c.l.b16 %v101
    %v125 = vunpack.c.l.b16 %v102
    %v126 = vunpack.c.l.b16 %v103
    %v127 = vunpack.c.l.b16 %v104
    %v128 = vunpack.c.l.b16 %v105
    %v129 = vunpack.c.l.b16 %v106
    %v130 = vpack.c.b16 %v123, %v122
    %v131 = vpack.c.b16 %v125, %v124
    %v132 = vpack.c.b16 %v127, %v126
    %v133 = vpack.c.b16 %v129, %v128
    %vm138 = vcmask 523264
    %v140 = vsel %vm138, %v98, 0
    %142 = vmatprep.subr.bf16.mxu0 0
    %143 = vmatpush1.bf16.msra.mxu0 0
    %144 = vmatprep.subr.bf16.mxu0 0
    %145 = vmatpush1.bf16.msra.mxu0 0
    %146 = vmatprep.subr.bf16.mxu0 0
    %147 = vmatpush1.bf16.msra.mxu0 0
    %148 = vmatprep.subr.bf16.mxu0 0
    %149 = vmatpush1.bf16.msra.mxu0 0
    %150 = vmatprep.subr.bf16.mxu0 0
    %151 = vmatpush1.bf16.msra.mxu0 %v133
    %152 = vmatprep.subr.bf16.mxu0 0
    %153 = vmatpush1.bf16.msra.mxu0 %v132
    %154 = vmatprep.subr.bf16.mxu0 0
    %155 = vmatpush1.bf16.msra.mxu0 %v131
    %156 = vmatprep.subr.bf16.mxu0 0
    %157 = vmatpush1.bf16.msra.mxu0 %v130
    %158 = vmatprep.subr.bf16.mxu0 0
    %159 = vmatpush2.bf16.msra.mxu0 0
    %160 = vmatprep.subr.bf16.mxu0 0
    %161 = vmatpush2.bf16.msra.mxu0 0
    %162 = vmatprep.subr.bf16.mxu0 0
    %163 = vmatpush2.bf16.msra.mxu0 0
    %164 = vmatprep.subr.bf16.mxu0 0
    %165 = vmatpush2.bf16.msra.mxu0 0
    %166 = vmatprep.subr.bf16.mxu0 0
    %167 = vmatpush2.bf16.msra.mxu0 0
    %168 = vmatprep.subr.bf16.mxu0 0
    %169 = vmatpush2.bf16.msra.mxu0 0
    %170 = vmatprep.subr.bf16.mxu0 0
    %171 = vmatpush2.bf16.msra.mxu0 0
    %172 = vmatprep.subr.bf16.mxu0 0
    %173 = vmatpush2.bf16.msra.mxu0 0
    %174 = vmatprep.mubr.bf16.mxu0 0
    %175 = vmatmul.mubr.bf16.gmra.mxu0 %v140
    %v176 = vpop.f32.mrf.mxu0
    %v177 = vadd.f32 %v112, %v176
    %v178 = vpop.f32.mrf.mxu0
    %v179 = vpop.f32.mrf.mxu0
    %v180 = vpop.f32.mrf.mxu0
    %181 = vdwg.mxu0
    %v182 = vmax.f32 %v177, 0.0
    %v183 = vpack.c.bf16 %v182, %v182
    %v184 = vld [vmem:[%s5] sm:$0xf]
    %v185 = vld [vmem:[%s5 + $0x4] sm:$0xf]
    %v186 = vld [vmem:[%s5 + $0x8] sm:$0xf]
    %v187 = vld [vmem:[%s5 + $0xc] sm:$0xf]
    %v188 = vld [vmem:[%s5 + $0x10] sm:$0xf]
    %v189 = vld [vmem:[%s5 + $0x14] sm:$0xf]
    %v190 = vld [vmem:[%s5 + $0x18] sm:$0xf]
    %v191 = vld [vmem:[%s5 + $0x1c] sm:$0xf]
    %v192 = vld [vmem:[%s5 + $0x20] sm:$0xf]
    %v193 = vld [vmem:[%s5 + $0x24] sm:$0xf]
    %v194 = vld [vmem:[%s5 + $0x28] sm:$0xf]
    %v195 = vld [vmem:[%s5 + $0x2c] sm:$0xf]
    %v196 = vld [vmem:[%s5 + $0x30] sm:$0xf]
    %v197 = vld [vmem:[%s5 + $0x34] sm:$0xf]
    %v198 = vld [vmem:[%s5 + $0x38] sm:$0xf]
    %v199 = vld [vmem:[%s5 + $0x3c] sm:$0xf]
    %v200 = vld [vmem:[%s6] sm:$0x1]
    %v202 = vlaneseq
    %v203 = vshrl.u32 %v202, 7
    %v204 = vsub.s32 0, %v203
    %v205 = vrot.slane %v200, %v204
    %v223 = vunpack.c.l.b16 %v184
    %v224 = vunpack.c.l.b16 %v185
    %v225 = vunpack.c.l.b16 %v186
    %v226 = vunpack.c.l.b16 %v187
    %v227 = vunpack.c.l.b16 %v188
    %v228 = vunpack.c.l.b16 %v189
    %v229 = vunpack.c.l.b16 %v190
    %v230 = vunpack.c.l.b16 %v191
    %v231 = vunpack.c.l.b16 %v192
    %v232 = vunpack.c.l.b16 %v193
    %v233 = vunpack.c.l.b16 %v194
    %v234 = vunpack.c.l.b16 %v195
    %v235 = vunpack.c.l.b16 %v196
    %v236 = vunpack.c.l.b16 %v197
    %v237 = vunpack.c.l.b16 %v198
    %v238 = vunpack.c.l.b16 %v199
    %v239 = vpack.c.b16 %v224, %v223
    %v240 = vpack.c.b16 %v226, %v225
    %v241 = vpack.c.b16 %v228, %v227
    %v242 = vpack.c.b16 %v230, %v229
    %v243 = vpack.c.b16 %v232, %v231
    %v244 = vpack.c.b16 %v234, %v233
    %v245 = vpack.c.b16 %v236, %v235
    %v246 = vpack.c.b16 %v238, %v237
    %255 = vmatprep.subr.bf16.mxu0 0
    %256 = vmatpush1.bf16.msra.mxu0 %v246
    %257 = vmatprep.subr.bf16.mxu0 0
    %258 = vmatpush1.bf16.msra.mxu0 %v245
    %259 = vmatprep.subr.bf16.mxu0 0
    %260 = vmatpush1.bf16.msra.mxu0 %v244
    %261 = vmatprep.subr.bf16.mxu0 0
    %262 = vmatpush1.bf16.msra.mxu0 %v243
    %263 = vmatprep.subr.bf16.mxu0 0
    %264 = vmatpush1.bf16.msra.mxu0 %v242
    %265 = vmatprep.subr.bf16.mxu0 0
    %266 = vmatpush1.bf16.msra.mxu0 %v241
    %267 = vmatprep.subr.bf16.mxu0 0
    %268 = vmatpush1.bf16.msra.mxu0 %v240
    %269 = vmatprep.subr.bf16.mxu0 0
    %270 = vmatpush1.bf16.msra.mxu0 %v239
    %271 = vmatprep.subr.bf16.mxu0 0
    %272 = vmatpush2.bf16.msra.mxu0 0
    %273 = vmatprep.subr.bf16.mxu0 0
    %274 = vmatpush2.bf16.msra.mxu0 0
    %275 = vmatprep.subr.bf16.mxu0 0
    %276 = vmatpush2.bf16.msra.mxu0 0
    %277 = vmatprep.subr.bf16.mxu0 0
    %278 = vmatpush2.bf16.msra.mxu0 0
    %279 = vmatprep.subr.bf16.mxu0 0
    %280 = vmatpush2.bf16.msra.mxu0 0
    %281 = vmatprep.subr.bf16.mxu0 0
    %282 = vmatpush2.bf16.msra.mxu0 0
    %283 = vmatprep.subr.bf16.mxu0 0
    %284 = vmatpush2.bf16.msra.mxu0 0
    %285 = vmatprep.subr.bf16.mxu0 0
    %286 = vmatpush2.bf16.msra.mxu0 0
    %287 = vmatprep.mubr.bf16.mxu0 0
    %288 = vmatmul.mubr.bf16.gmra.mxu0 %v183
    %v289 = vpop.f32.mrf.mxu0
    %v290 = vadd.f32 %v205, %v289
    %v291 = vpop.f32.mrf.mxu0
    %v292 = vpop.f32.mrf.mxu0
    %v293 = vpop.f32.mrf.mxu0
    %294 = vdwg.mxu0
    %vm295 = vcmask 80896
    %v296 = vsel %vm295, %v290, -inf
    %297 = vmax.xlane.f32.xlu0 %v296
    %v298 = vpop.xlane.xlu0 %297
    %v299 = vsub.f32 %v290, %v298
    %v300 = vmul.f32 %v299, 1.442695
    %v301 = vpow.pop %v300
    %v302 = vsel %vm295, %v301, 0.0
    %303 = vadd.xlane.f32.xlu0 %v302
    %v304 = vpop.xlane.xlu0 %303
    %v305 = vrcp.pop %v304
    %v306 = vmul.f32 %v301, %v305
    %307 = vst.msk [vmem:[#allocation2] sm:$0xff] %vm295, %v306
    // Predicated region
    $region30: #{tpu_custom_call.1} parent=1 // pred_check
      _
    $region31: #{tpu_custom_call.1} parent=1 // pred_check_branch
      %309 = sbr.rel (0) target = $region33
    $region32: #{tpu_custom_call.1} parent=1 // pred_region
      %s311 = ssub.s32 128, 128
      %312 = vsyncadd [#allocation3], %s311
      %s314 = sshll.u32 [#allocation2], 4
      %s315 = int_to_ptr.vmem [resolvable:$true] %s314
      %317 = dma.vmem_to_hbm [thread:$0]  %s315, 128, %s7, [#allocation3]
    $region33: #{tpu_custom_call.1} parent=1 // pred_fallthru
      _
    // Predicated region
    $region34: #{tpu_custom_call.1} parent=1 // pred_check
      _
    $region35: #{tpu_custom_call.1} parent=1 // pred_check_branch
      %319 = sbr.rel (0) target = $region37
    $region36: #{tpu_custom_call.1} parent=1 // pred_region
      %320 = dma.done [#allocation3], 128
    $region37: #{tpu_custom_call.1} parent=1 // pred_fallthru
      _
    %321 = vsyncpa [#allocation3], 1

</llo_original>
